<compile_context>
chip_gen: v5e
topology: v5e:2x2
jax: 0.10.0
libtpu: 0.0.40
codegen_flags: <defaults>
</compile_context>

<pallas_src>
import jax
import jax.numpy as jnp
from jax.experimental import pallas as pl
from jax.experimental.pallas import tpu as pltpu


# ---------------------------------------------------------------------------
# Primary path: zero-DMA aliased no-op (identity without any data movement).
# ---------------------------------------------------------------------------
def _alias_noop_kernel(x_ref, o_ref):
    # Output is aliased onto the donated input buffer, so the batch is already
    # "in" the output.  touch() pins the output ref as produced by this call
    # without generating any DMA.
    del x_ref
    pltpu.touch(o_ref)


def _forward_alias(x: jax.Array) -> jax.Array:
    return pl.pallas_call(
        _alias_noop_kernel,
        out_shape=jax.ShapeDtypeStruct(x.shape, x.dtype),
        in_specs=[pl.BlockSpec(memory_space=pl.ANY)],
        out_specs=pl.BlockSpec(memory_space=pl.ANY),
        input_output_aliases={0: 0},
        compiler_params=pltpu.CompilerParams(has_side_effects=True),
    )(x)


_forward_alias_jit = jax.jit(_forward_alias, donate_argnums=(0,))


# ---------------------------------------------------------------------------
# Fallback path: aliased, full-width, lane-dense tiled copy.
# ---------------------------------------------------------------------------
def _copy_kernel(x_ref, o_ref):
    o_ref[...] = x_ref[...]


def _sublane_multiple(dtype) -> int:
    # Row-tile multiple by element width (sub-32-bit dtypes pack along sublanes).
    itemsize = jnp.dtype(dtype).itemsize
    return {4: 8, 2: 16, 1: 32}.get(itemsize, 8)


def _flatten_2d(shape):
    """Pick a lane-dense 2-D working view (R, C) of the array."""
    total = 1
    for s in shape:
        total *= s
    if len(shape) >= 2 and shape[-1] % 128 == 0:
        return total // shape[-1], shape[-1]
    if total % 128 == 0:
        return total // 128, 128          # lane-dense slab, no masked stores
    last = shape[-1] if len(shape) >= 1 else 1
    return total // last, last


def _forward_copy(x: jax.Array, *, max_tile_rows: int = 4096) -> jax.Array:
    orig_shape = x.shape
    if x.ndim == 0:
        x = x.reshape(1, 1)
    R, C = _flatten_2d(x.shape)
    x2 = x.reshape(R, C)

    itemsize = jnp.dtype(x.dtype).itemsize
    sub = _sublane_multiple(x.dtype)

    # ~4 MiB full-width row slabs: contiguous HBM DMA, 1-D grid.
    target_bytes = 4 * 1024 * 1024
    rows = max(sub, target_bytes // max(1, C * itemsize))
    rows = min(rows, max_tile_rows)
    if rows >= R:
        tile_rows = R                      # full extent: always legal
    else:
        tile_rows = max(sub, (rows // sub) * sub)

    tile_bytes = tile_rows * C * itemsize
    # in + out, double-buffered (4 buffers) plus headroom; clamp so the limit
    # is legal on v7x's 64 MiB physical VMEM (and raises v5e's 16 MiB default).
    vmem_limit = int(min(max(16 * 1024 * 1024, 6 * tile_bytes), 32 * 1024 * 1024))

    out2 = pl.pallas_call(
        _copy_kernel,
        out_shape=jax.ShapeDtypeStruct((R, C), x.dtype),
        grid=(pl.cdiv(R, tile_rows),),
        in_specs=[pl.BlockSpec((tile_rows, C), lambda i: (i, 0))],
        out_specs=pl.BlockSpec((tile_rows, C), lambda i: (i, 0)),
        input_output_aliases={0: 0},
        compiler_params=pltpu.CompilerParams(
            dimension_semantics=("parallel",),
            vmem_limit_bytes=vmem_limit,
        ),
        cost_estimate=pl.CostEstimate(
            flops=0, transcendentals=0, bytes_accessed=2 * R * C * itemsize
        ),
    )(x2)
    return out2.reshape(orig_shape)


_forward_copy_jit = jax.jit(
    _forward_copy, donate_argnums=(0,), static_argnames=("max_tile_rows",)
)


# ---------------------------------------------------------------------------
# Dispatch: prefer the zero-DMA path; resolve its availability once with a
# throwaway probe so a real (donated) input is never handed to a failing call.
# ---------------------------------------------------------------------------
_ALIAS_PATH_OK = None


def _alias_path_available() -> bool:
    global _ALIAS_PATH_OK
    if _ALIAS_PATH_OK is None:
        try:
            probe = jnp.zeros((8, 128), jnp.float32)
            jax.block_until_ready(_forward_alias_jit(probe))
            _ALIAS_PATH_OK = True
        except Exception:
            _ALIAS_PATH_OK = False
    return _ALIAS_PATH_OK


def model_pjf_forward(x: jax.Array) -> jax.Array:
    """Pallas "forward" for the abstract Model_PJF base class (identity).

    The input buffer is donated and aliased onto the output; the preferred path
    moves no data at all.  Callers must not reuse `x` after the call.
    """
    if _alias_path_available():
        return _forward_alias_jit(x)
    return _forward_copy_jit(x)


if __name__ == "__main__":
    key = jax.random.PRNGKey(0)
    k1, k2, k3 = jax.random.split(key, 3)

    # Case 1: small lane-aligned batch (zero-DMA aliased path).
    x1 = jax.random.normal(k1, (8, 128), dtype=jnp.float32)
    ref1 = jax.device_get(x1)                     # host snapshot: x1 is donated
    out1 = jax.block_until_ready(model_pjf_forward(x1))

    # Case 2: odd, non-lane-aligned shape — the ANY-memory-space path is
    # shape-agnostic (no block-shape constraints apply).
    x2 = jax.random.normal(k2, (3, 5, 33), dtype=jnp.float32)
    ref2 = jax.device_get(x2)
    out2 = jax.block_until_ready(model_pjf_forward(x2))

    # Case 3: explicitly exercise the tiled-copy fallback kernel too
    # (wrapper-side lane-dense flattening of D=192 -> (450, 128), multi-block
    # 1-D grid with a ragged last row-block).
    x3 = jax.random.normal(k3, (300, 192), dtype=jnp.float32)
    ref3 = jax.device_get(x3)
    out3 = jax.block_until_ready(_forward_copy_jit(x3, max_tile_rows=128))

    # The base-class forward defines no transform; verify exact pass-through.
    for out, ref in ((out1, ref1), (out2, ref2), (out3, ref3)):
        assert out.shape == ref.shape and out.dtype == ref.dtype
        assert bool(jnp.all(out == jnp.asarray(ref)))

    print("KERNEL_OK")
</pallas_src>

<mosaic_0001>
module attributes {stable_mosaic.version = 11 : i64} {
  func.func @_alias_noop_kernel(%arg0: memref<8x128xf32, #tpu.memory_space<any>>, %arg1: memref<8x128xf32, #tpu.memory_space<any>>) attributes {dimension_semantics = [], scalar_prefetch = 0 : i64, scratch_operands = 0 : i64, tpu.core_type = #tpu.core_type<tc>} {
    return
  }
}

module attributes {stable_mosaic.version = 11 : i64} {
  func.func @_copy_kernel(%arg0: i32, %arg1: memref<8x128xf32, #tpu.memory_space<vmem>>, %arg2: memref<8x128xf32, #tpu.memory_space<vmem>>) attributes {dimension_semantics = [#tpu.dimension_semantics<parallel>], iteration_bounds = array<i64: 1>, scalar_prefetch = 0 : i64, scratch_operands = 0 : i64, tpu.core_type = #tpu.core_type<tc>, window_params = [{transform_indices = @transform_0, window_bounds = array<i64: 8, 128>}, {transform_indices = @transform_1, window_bounds = array<i64: 8, 128>}]} {
    %c0 = arith.constant 0 : index
    %c0_0 = arith.constant 0 : index
    %0 = vector.load %arg1[%c0, %c0_0] : memref<8x128xf32, #tpu.memory_space<vmem>>, vector<8x128xf32>
    %c0_1 = arith.constant 0 : index
    %c0_2 = arith.constant 0 : index
    %1 = vector.load %arg2[%c0_1, %c0_2] : memref<8x128xf32, #tpu.memory_space<vmem>>, vector<8x128xf32>
    tpu.vector_store %arg2[%c0_1, %c0_2], %0 {strides = array<i32>} : memref<8x128xf32, #tpu.memory_space<vmem>>, vector<8x128xf32>,
    return
  }
  func.func @transform_0(%arg0: i32) -> (i32, i32) {
    %c0_i32 = arith.constant 0 : i32
    %c0_i32_0 = arith.constant 0 : i32
    return %arg0, %c0_i32 : i32, i32
  }
  func.func @transform_1(%arg0: i32) -> (i32, i32) {
    %c0_i32 = arith.constant 0 : i32
    %c0_i32_0 = arith.constant 0 : i32
    return %arg0, %c0_i32 : i32, i32
  }
}

</mosaic_0001>

<llo_original>
// kernel: _forward_alias.1
$region0: #{_forward_alias.1}
  #allocation0 [shape = 'u32[]', space=smem, size = 0x4, offset = 0x4, fixed_abs, tag = 'smem constant byte address 0x4 - core index']
  #allocation1 [shape = 'u32[72,128]{1,0:T(1,128)}', space=vmem, size = 0x9000, scoped, tag = 'internal scratch']
  %s0 = inlined_call_operand.hbm [shape: f32[8,128], index: 0, kind: input, shape index: {}, may-alias: {0,1}]
  %s1 = inlined_call_operand.hbm [shape: f32[8,128], index: 1, kind: output, shape index: {}, may-alias: {0,1}]
  %s2 = sld [smem:[#allocation0]]
  $region2: #{_forward_alias.1} parent=0
    _
  %s4 = ssub.s32 1, %s2
  %s5 = scalar_select 0, %s4, %s2

// kernel: _forward_copy.1
$region0: #{_forward_copy.1}
  #allocation0 [shape = 'u32[]', space=smem, size = 0x4, offset = 0x4, fixed_abs, tag = 'smem constant byte address 0x4 - core index']
  #allocation1 [shape = 'u32[72,128]{1,0:T(1,128)}', space=vmem, size = 0x9000, scoped, tag = 'internal scratch']
  %s0 = inlined_call_operand.hbm [shape: f32[8,128], index: 0, kind: input, shape index: {}, may-alias: {0,1}]
  %s1 = inlined_call_operand.hbm [shape: f32[8,128], index: 1, kind: output, shape index: {}, may-alias: {0,1}]
  %s2 = sld [smem:[#allocation0]]
  $region18: #{_forward_copy.1} parent=0
    _
  %s4 = ssub.s32 1, %s2
  %s5 = scalar_select 0, %s4, %s2
  $region1: #{_forward_copy.1} parent=0
    #allocation2 [shape = 'u8[4096]{0}', space=vmem, size = 0x1000, scoped, tag = 'input window, operand 0, single buffered']
    #allocation3 [shape = 's32[1]{0}', space=sflag, size = 0x4, scoped, tag = 'scoped memory for _forward_copy.1']
    #allocation4 [shape = 's32[1]{0}', space=sflag, size = 0x4, scoped, tag = 'scoped memory for _forward_copy.1']
    #allocation5 [shape = 'u8[4096]{0}', space=vmem, size = 0x1000, scoped, tag = 'output window, operand 0, single buffered']
    %6 = vsyncpa [#allocation3], 0
    %7 = vsyncpa [#allocation4], 0
    // Predicated region
    $region2: #{_forward_copy.1} parent=1 // pred_check
      _
    $region3: #{_forward_copy.1} parent=1 // pred_check_branch
      %9 = sbr.rel (0) target = $region5
    $region4: #{_forward_copy.1} parent=1 // pred_region
      %11 = vsyncadd [#allocation3], 0
      %s13 = sshll.u32 %s0, 4
      %s14 = int_to_ptr.hbm [resolvable:$true] %s13
      %s15 = sshll.u32 [#allocation2], 4
      %s16 = int_to_ptr.vmem [resolvable:$true] %s15
      %18 = dma.hbm_to_vmem [thread:$0]  %s14, 128, %s16, [#allocation3]
    $region5: #{_forward_copy.1} parent=1 // pred_fallthru
      _
    // Predicated region
    $region6: #{_forward_copy.1} parent=1 // pred_check
      _
    $region7: #{_forward_copy.1} parent=1 // pred_check_branch
      %20 = sbr.rel (0) target = $region9
    $region8: #{_forward_copy.1} parent=1 // pred_region
      %22 = dma.done [#allocation3], 128
    $region9: #{_forward_copy.1} parent=1 // pred_fallthru
      _
    %v23 = vld [vmem:[#allocation2] sm:$0xff]
    %24 = vst [vmem:[#allocation5] sm:$0xff] %v23
    // Predicated region
    $region10: #{_forward_copy.1} parent=1 // pred_check
      _
    $region11: #{_forward_copy.1} parent=1 // pred_check_branch
      %26 = sbr.rel (0) target = $region13
    $region12: #{_forward_copy.1} parent=1 // pred_region
      %28 = vsyncadd [#allocation4], 0
      %s30 = sshll.u32 [#allocation5], 4
      %s31 = int_to_ptr.vmem [resolvable:$true] %s30
      %s32 = sshll.u32 %s1, 4
      %s33 = int_to_ptr.hbm [resolvable:$true] %s32
      %35 = dma.vmem_to_hbm [thread:$0]  %s31, 128, %s33, [#allocation4]
    $region13: #{_forward_copy.1} parent=1 // pred_fallthru
      _
    // Predicated region
    $region14: #{_forward_copy.1} parent=1 // pred_check
      _
    $region15: #{_forward_copy.1} parent=1 // pred_check_branch
      %37 = sbr.rel (0) target = $region17
    $region16: #{_forward_copy.1} parent=1 // pred_region
      %39 = dma.done [#allocation4], 128
    $region17: #{_forward_copy.1} parent=1 // pred_fallthru
      _
    %40 = vsyncpa [#allocation3], 1
    %41 = vsyncpa [#allocation4], 1

</llo_original>
